<compile_context>
chip_gen: v6e
topology: v6e:2x2x1
jax: 0.10.0
libtpu: 0.0.40
codegen_flags: <defaults>
</compile_context>

<pallas_src>
import jax
import jax.numpy as jnp
from jax.experimental import pallas as pl
from jax.experimental.pallas import tpu as pltpu


def _round_up(x, m):
    return -(-x // m) * m


def _fused_head_kernel(x_ref, w1_ref, b1_ref, w2_ref, b2_ref, w3_ref, b3_ref,
                       out_ref):
    # --- tiny GEMM chain: conv1/conv2 center taps + conv3 (1x1), with ReLUs.
    x = x_ref[...]                                                     # (B, Cin)
    h1 = jnp.dot(x, w1_ref[...], preferred_element_type=jnp.float32) + b1_ref[...]
    h1 = jnp.maximum(h1, 0.0)                                          # (B, 256)
    h2 = jnp.dot(h1, w2_ref[...], preferred_element_type=jnp.float32) + b2_ref[...]
    h2 = jnp.maximum(h2, 0.0)                                          # (B, 128)
    logits = (jnp.dot(h2, w3_ref[...], preferred_element_type=jnp.float32)
              + b3_ref[...])                                           # (B, C)

    B = x_ref.shape[0]
    C = w3_ref.shape[1]
    rows = out_ref.shape[0]                                            # == B * C

    # Expand logits (B, C) -> column (B*C, 1) without any reshape/relayout:
    # row r must hold logits[r // C, r % C].  Static loop over the (small)
    # batch using only iota + compare + where + lane-reduce (all VPU/XLU ops).
    r_ids = jax.lax.broadcasted_iota(jnp.int32, (rows, C), 0)
    c_ids = jax.lax.broadcasted_iota(jnp.int32, (rows, C), 1)
    col = jnp.zeros((rows, 1), jnp.float32)
    for b in range(B):                        # B is a static Python int
        match = r_ids == (c_ids + b * C)      # true iff r == b*C + c
        picked = jnp.where(match,
                           jnp.broadcast_to(logits[b:b + 1, :], (rows, C)),
                           0.0)
        col = col + jnp.sum(picked, axis=-1, keepdims=True)

    # Bilinear upsample of a 1x1 map == broadcast of the single pixel.
    out_ref[...] = jnp.broadcast_to(col, out_ref.shape).astype(out_ref.dtype)


def _pick_col_tile(rows, hw, *, dtype_bytes=4, target_bytes=4 << 20):
    """Lane-dense column tile: multiple of 128, <=~target_bytes per output
    buffer, and a balanced >=2-step grid (so both v7x TCs share the store)."""
    if hw <= 128:
        return hw                              # full dim; negligible size
    hw_pad = _round_up(hw, 128)
    rows_sub = max(_round_up(rows, 8), 8)      # on-chip sublane footprint
    max_cols = max(128, (target_bytes // (rows_sub * dtype_bytes)) // 128 * 128)
    n_steps = max(2, pl.cdiv(hw_pad, max_cols))
    tc = _round_up(pl.cdiv(hw, n_steps), 128)
    return int(max(128, min(tc, hw_pad)))


def segmentation_head_forward(x, params, img_size, *, col_tile=None,
                              out_dtype=jnp.float32):
    """Pallas forward of SegmentationHead.

    x:      (B, ...) with prod(...) == in_channels (matches x.view(B, -1, 1, 1))
    params: GEMM-reduced weights (w1, b1, w2, b2, w3, b3); w*: (K, N), b*: (1, N)
    returns (B, num_classes, H, W) in `out_dtype` (float32 matches the module;
            bf16 halves the HBM write traffic).
    """
    w1, b1, w2, b2, w3, b3 = (a.astype(jnp.float32) for a in params)
    B = x.shape[0]
    x2d = x.reshape(B, -1).astype(jnp.float32)
    num_classes = w3.shape[1]
    H, W = img_size
    HW = H * W
    rows = B * num_classes
    dtype_bytes = jnp.dtype(out_dtype).itemsize

    # --- lane-dense column tile (user value is rounded up to 128 lanes).
    if col_tile is not None:
        tc = min(_round_up(max(int(col_tile), 128), 128), _round_up(HW, 128))
        if HW <= 128:
            tc = HW
    else:
        tc = _pick_col_tile(rows, HW, dtype_bytes=dtype_bytes)
    grid = (pl.cdiv(HW, tc),)

    # --- VMEM budget: 2 output buffers + resident inputs (x2d + params) + slack,
    # capped at the 32 MiB scoped default so v7x (64 MiB physical) stays safe.
    rows_sub = max(_round_up(rows, 8), 8)
    out_buf = rows_sub * max(tc, 128) * dtype_bytes
    param_bytes = 4 * sum(int(a.size) for a in (x2d, w1, b1, w2, b2, w3, b3))
    need = 2 * out_buf + 2 * param_bytes + (6 << 20)
    vmem_budget = int(min(max(need, 8 << 20), 32 << 20))

    flops = 2 * B * (w1.shape[0] * w1.shape[1]
                     + w2.shape[0] * w2.shape[1]
                     + w3.shape[0] * w3.shape[1])
    cost = pl.CostEstimate(flops=int(flops), transcendentals=0,
                           bytes_accessed=int(rows * HW * dtype_bytes + param_bytes))

    const2 = lambda j: (0, 0)                  # resident full blocks
    out2d = pl.pallas_call(
        _fused_head_kernel,
        out_shape=jax.ShapeDtypeStruct((rows, HW), out_dtype),
        grid=grid,
        in_specs=[pl.BlockSpec(x2d.shape, const2),
                  pl.BlockSpec(w1.shape, const2),
                  pl.BlockSpec(b1.shape, const2),
                  pl.BlockSpec(w2.shape, const2),
                  pl.BlockSpec(b2.shape, const2),
                  pl.BlockSpec(w3.shape, const2),
                  pl.BlockSpec(b3.shape, const2)],
        out_specs=pl.BlockSpec((rows, tc), lambda j: (0, j)),
        compiler_params=pltpu.CompilerParams(
            dimension_semantics=(pltpu.PARALLEL,),
            vmem_limit_bytes=vmem_budget,
        ),
        cost_estimate=cost,
    )(x2d, w1, b1, w2, b2, w3, b3)

    # Contiguous reshape (free): (B*C, H*W) -> (B, C, H, W).
    return out2d.reshape(B, num_classes, H, W)


if __name__ == "__main__":
    # Small deterministic setup consistent with the module: x is a (B, C, H, W)
    # feature map that forward() flattens to 1x1 spatial, in_channels = C*H*W.
    B, C_feat, Hf, Wf = 2, 4, 16, 16
    in_channels = C_feat * Hf * Wf             # 1024
    num_classes = 3
    img_size = (16, 16)

    key = jax.random.PRNGKey(0)
    ks = jax.random.split(key, 7)
    # PyTorch parameter shapes from __init__ (He-ish scaling keeps values O(1)).
    conv1_w = jax.random.normal(ks[0], (256, in_channels, 3, 3), jnp.float32) * 0.044
    conv1_b = jax.random.normal(ks[1], (256,), jnp.float32) * 0.1
    conv2_w = jax.random.normal(ks[2], (128, 256, 3, 3), jnp.float32) * 0.088
    conv2_b = jax.random.normal(ks[3], (128,), jnp.float32) * 0.1
    conv3_w = jax.random.normal(ks[4], (num_classes, 128, 1, 1), jnp.float32) * 0.125
    conv3_b = jax.random.normal(ks[5], (num_classes,), jnp.float32) * 0.1
    x = jax.random.normal(ks[6], (B, C_feat, Hf, Wf), jnp.float32)

    # Reduce convs to GEMMs (center tap of the 3x3 convs on a padded 1x1 map).
    w1 = conv1_w[:, :, 1, 1].T                 # (in_channels, 256)
    b1 = conv1_b.reshape(1, -1)
    w2 = conv2_w[:, :, 1, 1].T                 # (256, 128)
    b2 = conv2_b.reshape(1, -1)
    w3 = conv3_w[:, :, 0, 0].T                 # (128, num_classes)
    b3 = conv3_b.reshape(1, -1)
    params = (w1, b1, w2, b2, w3, b3)

    # Plain-JAX reference of the whole forward pass.
    x2d = x.reshape(B, -1)
    h1 = jnp.maximum(x2d @ w1 + b1, 0.0)
    h2 = jnp.maximum(h1 @ w2 + b2, 0.0)
    logits = h2 @ w3 + b3

    def ref_out(size):
        return jnp.broadcast_to(logits[:, :, None, None],
                                (B, num_classes, size[0], size[1]))

    # 1) Default tiling (balanced 2-step grid at this size), float32 output.
    out = jax.block_until_ready(segmentation_head_forward(x, params, img_size))
    assert out.shape == (B, num_classes, *img_size), out.shape
    assert jnp.allclose(out, ref_out(img_size), atol=1e-2, rtol=1e-2)

    # 2) Odd spatial size + non-multiple-of-128 user tile (rounded up inside),
    #    exercising the boundary-masked final grid step.
    odd_size = (15, 21)
    out2 = jax.block_until_ready(
        segmentation_head_forward(x, params, odd_size, col_tile=100))
    assert out2.shape == (B, num_classes, *odd_size), out2.shape
    assert jnp.allclose(out2, ref_out(odd_size), atol=1e-2, rtol=1e-2)

    # 3) bf16 output path (halves the HBM store, the kernel's only real cost).
    out3 = jax.block_until_ready(
        segmentation_head_forward(x, params, img_size, out_dtype=jnp.bfloat16))
    assert out3.dtype == jnp.bfloat16
    assert jnp.allclose(out3.astype(jnp.float32), ref_out(img_size),
                        atol=5e-2, rtol=5e-2)

    print("KERNEL_OK")
</pallas_src>

<mosaic_0001>
module attributes {stable_mosaic.version = 11 : i64} {
  func.func @_fused_head_kernel(%arg0: i32, %arg1: memref<2x1024xf32, #tpu.memory_space<vmem>>, %arg2: memref<1024x256xf32, #tpu.memory_space<vmem>>, %arg3: memref<1x256xf32, #tpu.memory_space<vmem>>, %arg4: memref<256x128xf32, #tpu.memory_space<vmem>>, %arg5: memref<1x128xf32, #tpu.memory_space<vmem>>, %arg6: memref<128x3xf32, #tpu.memory_space<vmem>>, %arg7: memref<1x3xf32, #tpu.memory_space<vmem>>, %arg8: memref<6x128xf32, #tpu.memory_space<vmem>>) attributes {dimension_semantics = [#tpu.dimension_semantics<parallel>], iteration_bounds = array<i64: 2>, scalar_prefetch = 0 : i64, scratch_operands = 0 : i64, tpu.core_type = #tpu.core_type<tc>, window_params = [{pipeline_mode = #tpu.pipeline_mode<synchronous>, transform_indices = @transform_0, window_bounds = array<i64: 2, 1024>}, {pipeline_mode = #tpu.pipeline_mode<synchronous>, transform_indices = @transform_1, window_bounds = array<i64: 1024, 256>}, {pipeline_mode = #tpu.pipeline_mode<synchronous>, transform_indices = @transform_2, window_bounds = array<i64: 1, 256>}, {pipeline_mode = #tpu.pipeline_mode<synchronous>, transform_indices = @transform_3, window_bounds = array<i64: 256, 128>}, {pipeline_mode = #tpu.pipeline_mode<synchronous>, transform_indices = @transform_4, window_bounds = array<i64: 1, 128>}, {pipeline_mode = #tpu.pipeline_mode<synchronous>, transform_indices = @transform_5, window_bounds = array<i64: 128, 3>}, {pipeline_mode = #tpu.pipeline_mode<synchronous>, transform_indices = @transform_6, window_bounds = array<i64: 1, 3>}, {transform_indices = @transform_7, window_bounds = array<i64: 6, 128>}]} {
    %c0 = arith.constant 0 : index
    %c0_0 = arith.constant 0 : index
    %0 = vector.load %arg1[%c0, %c0_0] : memref<2x1024xf32, #tpu.memory_space<vmem>>, vector<2x1024xf32>
    %c0_1 = arith.constant 0 : index
    %c0_2 = arith.constant 0 : index
    %1 = vector.load %arg2[%c0_1, %c0_2] : memref<1024x256xf32, #tpu.memory_space<vmem>>, vector<1024x256xf32>
    %cst = arith.constant dense<0.000000e+00> : vector<2x256xf32>
    %2 = tpu.matmul %0, %1, %cst {dimension_numbers = #tpu.dot_dimension_numbers<[1], [0], [0], [1], [0, 0, 1, 1], [], []>} : vector<2x1024xf32>, vector<1024x256xf32>, vector<2x256xf32> -> vector<2x256xf32>
    %c0_3 = arith.constant 0 : index
    %c0_4 = arith.constant 0 : index
    %3 = vector.load %arg3[%c0_3, %c0_4] : memref<1x256xf32, #tpu.memory_space<vmem>>, vector<1x256xf32>
    %4 = vector.broadcast %3 : vector<1x256xf32> to vector<2x256xf32>
    %5 = arith.addf %2, %4 : vector<2x256xf32>
    %cst_5 = arith.constant 0.000000e+00 : f32
    %6 = vector.broadcast %cst_5 : f32 to vector<2x256xf32>
    %7 = arith.maximumf %5, %6 : vector<2x256xf32>
    %c0_6 = arith.constant 0 : index
    %c0_7 = arith.constant 0 : index
    %8 = vector.load %arg4[%c0_6, %c0_7] : memref<256x128xf32, #tpu.memory_space<vmem>>, vector<256x128xf32>
    %cst_8 = arith.constant dense<0.000000e+00> : vector<2x128xf32>
    %9 = tpu.matmul %7, %8, %cst_8 {dimension_numbers = #tpu.dot_dimension_numbers<[1], [0], [0], [1], [0, 0, 1, 1], [], []>} : vector<2x256xf32>, vector<256x128xf32>, vector<2x128xf32> -> vector<2x128xf32>
    %c0_9 = arith.constant 0 : index
    %c0_10 = arith.constant 0 : index
    %10 = vector.load %arg5[%c0_9, %c0_10] : memref<1x128xf32, #tpu.memory_space<vmem>>, vector<1x128xf32>
    %11 = vector.broadcast %10 : vector<1x128xf32> to vector<2x128xf32>
    %12 = arith.addf %9, %11 : vector<2x128xf32>
    %cst_11 = arith.constant 0.000000e+00 : f32
    %13 = vector.broadcast %cst_11 : f32 to vector<2x128xf32>
    %14 = arith.maximumf %12, %13 : vector<2x128xf32>
    %c0_12 = arith.constant 0 : index
    %c0_13 = arith.constant 0 : index
    %15 = vector.load %arg6[%c0_12, %c0_13] : memref<128x3xf32, #tpu.memory_space<vmem>>, vector<128x3xf32>
    %cst_14 = arith.constant dense<0.000000e+00> : vector<2x3xf32>
    %16 = tpu.matmul %14, %15, %cst_14 {dimension_numbers = #tpu.dot_dimension_numbers<[1], [0], [0], [1], [0, 0, 1, 1], [], []>} : vector<2x128xf32>, vector<128x3xf32>, vector<2x3xf32> -> vector<2x3xf32>
    %c0_15 = arith.constant 0 : index
    %c0_16 = arith.constant 0 : index
    %17 = vector.load %arg7[%c0_15, %c0_16] : memref<1x3xf32, #tpu.memory_space<vmem>>, vector<1x3xf32>
    %18 = vector.broadcast %17 : vector<1x3xf32> to vector<2x3xf32>
    %19 = arith.addf %16, %18 : vector<2x3xf32>
    %20 = tpu.iota {dimensions = array<i32: 0>} : vector<6x3xi32>
    %21 = tpu.iota {dimensions = array<i32: 1>} : vector<6x3xi32>
    %cst_17 = arith.constant 0.000000e+00 : f32
    %22 = vector.broadcast %cst_17 : f32 to vector<6x1xf32>
    %c0_i32 = arith.constant 0 : i32
    %23 = vector.broadcast %c0_i32 : i32 to vector<6x3xi32>
    %24 = arith.addi %21, %23 : vector<6x3xi32>
    %25 = arith.cmpi eq, %20, %24 : vector<6x3xi32>
    %26 = vector.extract_strided_slice %19 {offsets = [0, 0], sizes = [1, 3], strides = [1, 1]} : vector<2x3xf32> to vector<1x3xf32>
    %27 = vector.shape_cast %26 : vector<1x3xf32> to vector<1x3xf32>
    %28 = vector.broadcast %27 : vector<1x3xf32> to vector<6x3xf32>
    %cst_18 = arith.constant 0.000000e+00 : f32
    %29 = vector.broadcast %cst_18 : f32 to vector<6x3xf32>
    %30 = arith.select %25, %28, %29 : vector<6x3xi1>, vector<6x3xf32>
    %cst_19 = arith.constant dense<0.000000e+00> : vector<6xf32>
    %31 = vector.multi_reduction <add>, %30, %cst_19 [1] : vector<6x3xf32> to vector<6xf32>
    %32 = vector.shape_cast %31 : vector<6xf32> to vector<6x1xf32>
    %33 = arith.addf %22, %32 : vector<6x1xf32>
    %c3_i32 = arith.constant 3 : i32
    %34 = vector.broadcast %c3_i32 : i32 to vector<6x3xi32>
    %35 = arith.addi %21, %34 : vector<6x3xi32>
    %36 = arith.cmpi eq, %20, %35 : vector<6x3xi32>
    %37 = vector.extract_strided_slice %19 {offsets = [1, 0], sizes = [1, 3], strides = [1, 1]} : vector<2x3xf32> to vector<1x3xf32>
    %38 = vector.shape_cast %37 : vector<1x3xf32> to vector<1x3xf32>
    %39 = vector.broadcast %38 : vector<1x3xf32> to vector<6x3xf32>
    %cst_20 = arith.constant 0.000000e+00 : f32
    %40 = vector.broadcast %cst_20 : f32 to vector<6x3xf32>
    %41 = arith.select %36, %39, %40 : vector<6x3xi1>, vector<6x3xf32>
    %cst_21 = arith.constant dense<0.000000e+00> : vector<6xf32>
    %42 = vector.multi_reduction <add>, %41, %cst_21 [1] : vector<6x3xf32> to vector<6xf32>
    %43 = vector.shape_cast %42 : vector<6xf32> to vector<6x1xf32>
    %44 = arith.addf %33, %43 : vector<6x1xf32>
    %45 = vector.shape_cast %44 : vector<6x1xf32> to vector<6x1xf32>
    %46 = vector.broadcast %45 : vector<6x1xf32> to vector<6x128xf32>
    %c0_22 = arith.constant 0 : index
    %c0_23 = arith.constant 0 : index
    %47 = vector.load %arg8[%c0_22, %c0_23] : memref<6x128xf32, #tpu.memory_space<vmem>>, vector<6x128xf32>
    tpu.vector_store %arg8[%c0_22, %c0_23], %46 {strides = array<i32>} : memref<6x128xf32, #tpu.memory_space<vmem>>, vector<6x128xf32>,
    return
  }
  func.func @transform_0(%arg0: i32) -> (i32, i32) {
    %c0_i32 = arith.constant 0 : i32
    %c0_i32_0 = arith.constant 0 : i32
    %c0_i32_1 = arith.constant 0 : i32
    return %c0_i32, %c0_i32_0 : i32, i32
  }
  func.func @transform_1(%arg0: i32) -> (i32, i32) {
    %c0_i32 = arith.constant 0 : i32
    %c0_i32_0 = arith.constant 0 : i32
    %c0_i32_1 = arith.constant 0 : i32
    return %c0_i32, %c0_i32_0 : i32, i32
  }
  func.func @transform_2(%arg0: i32) -> (i32, i32) {
    %c0_i32 = arith.constant 0 : i32
    %c0_i32_0 = arith.constant 0 : i32
    %c0_i32_1 = arith.constant 0 : i32
    return %c0_i32, %c0_i32_0 : i32, i32
  }
  func.func @transform_3(%arg0: i32) -> (i32, i32) {
    %c0_i32 = arith.constant 0 : i32
    %c0_i32_0 = arith.constant 0 : i32
    %c0_i32_1 = arith.constant 0 : i32
    return %c0_i32, %c0_i32_0 : i32, i32
  }
  func.func @transform_4(%arg0: i32) -> (i32, i32) {
    %c0_i32 = arith.constant 0 : i32
    %c0_i32_0 = arith.constant 0 : i32
    %c0_i32_1 = arith.constant 0 : i32
    return %c0_i32, %c0_i32_0 : i32, i32
  }
  func.func @transform_5(%arg0: i32) -> (i32, i32) {
    %c0_i32 = arith.constant 0 : i32
    %c0_i32_0 = arith.constant 0 : i32
    %c0_i32_1 = arith.constant 0 : i32
    return %c0_i32, %c0_i32_0 : i32, i32
  }
  func.func @transform_6(%arg0: i32) -> (i32, i32) {
    %c0_i32 = arith.constant 0 : i32
    %c0_i32_0 = arith.constant 0 : i32
    %c0_i32_1 = arith.constant 0 : i32
    return %c0_i32, %c0_i32_0 : i32, i32
  }
  func.func @transform_7(%arg0: i32) -> (i32, i32) {
    %c0_i32 = arith.constant 0 : i32
    %c0_i32_0 = arith.constant 0 : i32
    return %c0_i32, %arg0 : i32, i32
  }
}

</mosaic_0001>

<llo_original>
// kernel: tpu_custom_call.1
$region0: #{tpu_custom_call.1}
  #allocation0 [shape = 'u32[]', space=smem, size = 0x4, offset = 0x4, fixed_abs, tag = 'smem constant byte address 0x4 - core index']
  #allocation1 [shape = 'u32[144,128]{1,0:T(1,128)}', space=vmem, size = 0x12000, scoped, tag = 'internal scratch']
  %s0 = inlined_call_operand.vmem [shape: f32[2,1024], index: 0, kind: input, shape index: {}]
  %s1 = inlined_call_operand.hbm [shape: f32[1024,256], index: 1, kind: input, shape index: {}]
  %s2 = inlined_call_operand.vmem [shape: f32[1,256], index: 2, kind: input, shape index: {}]
  %s3 = inlined_call_operand.hbm [shape: f32[256,128], index: 3, kind: input, shape index: {}]
  %s4 = inlined_call_operand.vmem [shape: f32[1,128], index: 4, kind: input, shape index: {}]
  %s5 = inlined_call_operand.vmem [shape: f32[128,3], index: 5, kind: input, shape index: {}]
  %s6 = inlined_call_operand.vmem [shape: f32[1,3], index: 6, kind: input, shape index: {}]
  %s7 = inlined_call_operand.hbm [shape: f32[6,256], index: 7, kind: output, shape index: {}]
  %s8 = sld [smem:[#allocation0]]
  $region69: #{tpu_custom_call.1} parent=0
    _
  %s10 = ssub.s32 1, %s8
  %s11 = scalar_select 0, %s10, %s8
  $region1: #{tpu_custom_call.1} parent=0
    #allocation2 [shape = 'u8[1048576]{0}', space=vmem, size = 0x100000, scoped, tag = 'input window, operand 1, single buffered']
    #allocation3 [shape = 's32[2]{0}', space=sflag, size = 0x8, scoped, tag = 'scoped memory for tpu_custom_call.1']
    #allocation4 [shape = 's32[2]{0}', space=sflag, size = 0x8, scoped, tag = 'scoped memory for tpu_custom_call.1']
    #allocation5 [shape = 'u8[131072]{0}', space=vmem, size = 0x20000, scoped, tag = 'input window, operand 3, single buffered']
    #allocation6 [shape = 's32[1]{0}', space=sflag, size = 0x4, scoped, tag = 'scoped memory for tpu_custom_call.1']
    #allocation7 [shape = 'u8[8192]{0}', space=vmem, size = 0x2000, scoped, tag = 'output window, operand 0']
    %12 = vsyncpa [#allocation3], 0
    %13 = vsyncpa [#allocation6], 0
    %14 = vsyncpa [#allocation4], 0
    %s15 = scalar_lea.sflag [#allocation4], 1
    %16 = vsyncpa %s15, 0
    loop: start=0, step=1, limit=4
    $region2: #{tpu_custom_call.1} parent=1 // loop_pre_header
      _
    $region3: #{tpu_custom_call.1} parent=1 // loop_header
      %s18 = sphi 0, %s22
      %p19 = scmp.ge.s32.totalorder %s18, 4
      %s26 = sphi 0, %s26
      %s28 = sphi 0, %s26
      %s29 = sphi 0, %s28
      %s43 = sphi 0, %s29
      %s47 = sphi 0, %s47
      %s49 = sphi 0, %s47
      %s50 = sphi 0, %s49
      %s64 = sphi 0, %s50
      %s68 = sphi 0, %s68
      %s70 = sphi 0, %s68
      %s71 = sphi 0, %s70
      %s85 = sphi 0, %s71
      %s89 = sphi 0, %s89
      %s91 = sphi 0, %s89
      %s92 = sphi 0, %s91
      %s106 = sphi 0, %s92
      %s110 = sphi 0, %s110
      %s112 = sphi 0, %s110
      %s113 = sphi 0, %s112
      %s127 = sphi 0, %s113
      %s131 = sphi 0, %s131
      %s133 = sphi 0, %s131
      %s134 = sphi 0, %s133
      %s148 = sphi 0, %s134
      %s152 = sphi 0, %s152
      %s154 = sphi 0, %s152
      %s155 = sphi 0, %s154
      %s169 = sphi 0, %s155
      %s175 = sphi 0, %s177
      %s178 = sphi 0, %s175
      %s179 = sphi 0, %s178
      %s195 = sphi 0, %s179
    $region4: #{tpu_custom_call.1} parent=1 // loop_header_branch
      %21 = sbr.rel (%p19) target = $region8
    $region5: #{tpu_custom_call.1} parent=1 // loop_body
      %s23 = ssub.s32 %s18, 1
      %s24 = ssub.s32 %s18, 2
      %s25 = sadd.s32 %s18, 1
      %s27 = sadd.s32 %s26, 1
      %p30 = scmp.eq.s32.totalorder %s18, 1
      %p31 = scmp.ne.s32.totalorder %s26, %s28
      %p32 = scmp.eq.s32.totalorder %s18, 0
      %p33 = por %p31, %p32
      %p34 = scmp.ne.s32.totalorder %s26, %s28
      %p35 = scmp.eq.s32.totalorder %s23, 1
      %p36 = por %p34, %p35
      %p37 = scmp.ne.s32.totalorder %s28, %s29
      %p38 = scmp.eq.s32.totalorder %s23, 0
      %p39 = por %p37, %p38
      %p40 = scmp.ne.s32.totalorder %s28, %s29
      %p41 = scmp.eq.s32.totalorder %s24, 1
      %p42 = por %p40, %p41
      %p44 = scmp.ne.s32.totalorder %s29, %s43
      %p45 = scmp.eq.s32.totalorder %s24, 0
      %p46 = por %p44, %p45
      %s48 = sadd.s32 %s47, 1
      %p51 = scmp.eq.s32.totalorder %s18, 1
      %p52 = scmp.ne.s32.totalorder %s47, %s49
      %p53 = scmp.eq.s32.totalorder %s18, 0
      %p54 = por %p52, %p53
      %p55 = scmp.ne.s32.totalorder %s47, %s49
      %p56 = scmp.eq.s32.totalorder %s23, 1
      %p57 = por %p55, %p56
      %p58 = scmp.ne.s32.totalorder %s49, %s50
      %p59 = scmp.eq.s32.totalorder %s23, 0
      %p60 = por %p58, %p59
      %p61 = scmp.ne.s32.totalorder %s49, %s50
      %p62 = scmp.eq.s32.totalorder %s24, 1
      %p63 = por %p61, %p62
      %p65 = scmp.ne.s32.totalorder %s50, %s64
      %p66 = scmp.eq.s32.totalorder %s24, 0
      %p67 = por %p65, %p66
      %s69 = sadd.s32 %s68, 1
      %p72 = scmp.eq.s32.totalorder %s18, 1
      %p73 = scmp.ne.s32.totalorder %s68, %s70
      %p74 = scmp.eq.s32.totalorder %s18, 0
      %p75 = por %p73, %p74
      %p76 = scmp.ne.s32.totalorder %s68, %s70
      %p77 = scmp.eq.s32.totalorder %s23, 1
      %p78 = por %p76, %p77
      %p79 = scmp.ne.s32.totalorder %s70, %s71
      %p80 = scmp.eq.s32.totalorder %s23, 0
      %p81 = por %p79, %p80
      %p82 = scmp.ne.s32.totalorder %s70, %s71
      %p83 = scmp.eq.s32.totalorder %s24, 1
      %p84 = por %p82, %p83
      %p86 = scmp.ne.s32.totalorder %s71, %s85
      %p87 = scmp.eq.s32.totalorder %s24, 0
      %p88 = por %p86, %p87
      %s90 = sadd.s32 %s89, 1
      %p93 = scmp.eq.s32.totalorder %s18, 1
      %p94 = scmp.ne.s32.totalorder %s89, %s91
      %p95 = scmp.eq.s32.totalorder %s18, 0
      %p96 = por %p94, %p95
      %p97 = scmp.ne.s32.totalorder %s89, %s91
      %p98 = scmp.eq.s32.totalorder %s23, 1
      %p99 = por %p97, %p98
      %p100 = scmp.ne.s32.totalorder %s91, %s92
      %p101 = scmp.eq.s32.totalorder %s23, 0
      %p102 = por %p100, %p101
      %p103 = scmp.ne.s32.totalorder %s91, %s92
      %p104 = scmp.eq.s32.totalorder %s24, 1
      %p105 = por %p103, %p104
      %p107 = scmp.ne.s32.totalorder %s92, %s106
      %p108 = scmp.eq.s32.totalorder %s24, 0
      %p109 = por %p107, %p108
      %s111 = sadd.s32 %s110, 1
      %p114 = scmp.eq.s32.totalorder %s18, 1
      %p115 = scmp.ne.s32.totalorder %s110, %s112
      %p116 = scmp.eq.s32.totalorder %s18, 0
      %p117 = por %p115, %p116
      %p118 = scmp.ne.s32.totalorder %s110, %s112
      %p119 = scmp.eq.s32.totalorder %s23, 1
      %p120 = por %p118, %p119
      %p121 = scmp.ne.s32.totalorder %s112, %s113
      %p122 = scmp.eq.s32.totalorder %s23, 0
      %p123 = por %p121, %p122
      %p124 = scmp.ne.s32.totalorder %s112, %s113
      %p125 = scmp.eq.s32.totalorder %s24, 1
      %p126 = por %p124, %p125
      %p128 = scmp.ne.s32.totalorder %s113, %s127
      %p129 = scmp.eq.s32.totalorder %s24, 0
      %p130 = por %p128, %p129
      %s132 = sadd.s32 %s131, 1
      %p135 = scmp.eq.s32.totalorder %s18, 1
      %p136 = scmp.ne.s32.totalorder %s131, %s133
      %p137 = scmp.eq.s32.totalorder %s18, 0
      %p138 = por %p136, %p137
      %p139 = scmp.ne.s32.totalorder %s131, %s133
      %p140 = scmp.eq.s32.totalorder %s23, 1
      %p141 = por %p139, %p140
      %p142 = scmp.ne.s32.totalorder %s133, %s134
      %p143 = scmp.eq.s32.totalorder %s23, 0
      %p144 = por %p142, %p143
      %p145 = scmp.ne.s32.totalorder %s133, %s134
      %p146 = scmp.eq.s32.totalorder %s24, 1
      %p147 = por %p145, %p146
      %p149 = scmp.ne.s32.totalorder %s134, %s148
      %p150 = scmp.eq.s32.totalorder %s24, 0
      %p151 = por %p149, %p150
      %s153 = sadd.s32 %s152, 1
      %p156 = scmp.eq.s32.totalorder %s18, 1
      %p157 = scmp.ne.s32.totalorder %s152, %s154
      %p158 = scmp.eq.s32.totalorder %s18, 0
      %p159 = por %p157, %p158
      %p160 = scmp.ne.s32.totalorder %s152, %s154
      %p161 = scmp.eq.s32.totalorder %s23, 1
      %p162 = por %p160, %p161
      %p163 = scmp.ne.s32.totalorder %s154, %s155
      %p164 = scmp.eq.s32.totalorder %s23, 0
      %p165 = por %p163, %p164
      %p166 = scmp.ne.s32.totalorder %s154, %s155
      %p167 = scmp.eq.s32.totalorder %s24, 1
      %p168 = por %p166, %p167
      %p170 = scmp.ne.s32.totalorder %s155, %s169
      %p171 = scmp.eq.s32.totalorder %s24, 0
      %p172 = por %p170, %p171
      %s173 = ssub.s32 %s18, %s25
      %p174 = scmp.eq.s32.totalorder %s173, 0
      %s176 = sadd.s32 %s175, 1
      %s177 = scalar_select %p174, %s175, %s176
      %p180 = pneg %p174
      %p181 = scmp.eq.s32.totalorder %s18, 1
      %p182 = por %p180, %p181
      %p183 = scmp.ne.s32.totalorder %s175, %s178
      %p184 = scmp.eq.s32.totalorder %s18, 0
      %p185 = por %p183, %p184
      %p186 = scmp.ne.s32.totalorder %s175, %s178
      %p187 = scmp.eq.s32.totalorder %s23, 1
      %p188 = por %p186, %p187
      %p189 = scmp.ne.s32.totalorder %s178, %s179
      %p190 = scmp.eq.s32.totalorder %s23, 0
      %p191 = por %p189, %p190
      %p192 = scmp.ne.s32.totalorder %s178, %s179
      %p193 = scmp.eq.s32.totalorder %s24, 1
      %p194 = por %p192, %p193
      %p196 = scmp.ne.s32.totalorder %s179, %s195
      %p197 = scmp.eq.s32.totalorder %s24, 0
      %p198 = por %p196, %p197
      %p199 = scmp.le.s32.totalorder 1, %s18
      %p200 = scmp.lt.s32.totalorder %s18, 3
      %p201 = pnand %p199, %p200
      %p202 = pneg %p201
      // Predicated region
      $region9: #{tpu_custom_call.1} parent=5 // pred_check
        _
      $region10: #{tpu_custom_call.1} parent=5 // pred_check_branch
        %204 = sbr.rel (%p201) target = $region12
      $region11: #{tpu_custom_call.1} parent=5 // pred_region
        %s205 = ssub.s32 %s18, 1
        // Predicated region
        $region13: #{tpu_custom_call.1} parent=11 // pred_check
          %p206 = pneg %p39
        $region14: #{tpu_custom_call.1} parent=11 // pred_check_branch
          %208 = sbr.rel (%p206) target = $region16
        $region15: #{tpu_custom_call.1} parent=11 // pred_region
          _
        $region16: #{tpu_custom_call.1} parent=11 // pred_fallthru
          _
        // Predicated region
        $region17: #{tpu_custom_call.1} parent=11 // pred_check
          %p209 = pneg %p60
        $region18: #{tpu_custom_call.1} parent=11 // pred_check_branch
          %211 = sbr.rel (%p209) target = $region20
        $region19: #{tpu_custom_call.1} parent=11 // pred_region
          %s213 = ssub.s32 32768, 32768
          %214 = vsyncadd [#allocation3], %s213
          %s215 = sshll.u32 [#allocation2], 4
          %s216 = int_to_ptr.vmem [resolvable:$true] %s215
          %221 = dma.hbm_to_vmem [thread:$0]  %s1, 32768, %s216, [#allocation3], 256, 256, 16
        $region20: #{tpu_custom_call.1} parent=11 // pred_fallthru
          _
        // Predicated region
        $region21: #{tpu_custom_call.1} parent=11 // pred_check
          %p222 = pneg %p81
        $region22: #{tpu_custom_call.1} parent=11 // pred_check_branch
          %224 = sbr.rel (%p222) target = $region24
        $region23: #{tpu_custom_call.1} parent=11 // pred_region
          _
        $region24: #{tpu_custom_call.1} parent=11 // pred_fallthru
          _
        // Predicated region
        $region25: #{tpu_custom_call.1} parent=11 // pred_check
          %p225 = pneg %p102
        $region26: #{tpu_custom_call.1} parent=11 // pred_check_branch
          %227 = sbr.rel (%p225) target = $region28
        $region27: #{tpu_custom_call.1} parent=11 // pred_region
          %s229 = ssub.s32 4096, 4096
          %230 = vsyncadd [#allocation6], %s229
          %s231 = sshll.u32 [#allocation5], 4
          %s232 = int_to_ptr.vmem [resolvable:$true] %s231
          %237 = dma.hbm_to_vmem [thread:$0]  %s3, 4096, %s232, [#allocation6], 128, 128, 8
        $region28: #{tpu_custom_call.1} parent=11 // pred_fallthru
          _
        // Predicated region
        $region29: #{tpu_custom_call.1} parent=11 // pred_check
          %p238 = pneg %p123
        $region30: #{tpu_custom_call.1} parent=11 // pred_check_branch
          %240 = sbr.rel (%p238) target = $region32
        $region31: #{tpu_custom_call.1} parent=11 // pred_region
          _
        $region32: #{tpu_custom_call.1} parent=11 // pred_fallthru
          _
        // Predicated region
        $region33: #{tpu_custom_call.1} parent=11 // pred_check
          %p241 = pneg %p144
        $region34: #{tpu_custom_call.1} parent=11 // pred_check_branch
          %243 = sbr.rel (%p241) target = $region36
        $region35: #{tpu_custom_call.1} parent=11 // pred_region
          _
        $region36: #{tpu_custom_call.1} parent=11 // pred_fallthru
          _
        // Predicated region
        $region37: #{tpu_custom_call.1} parent=11 // pred_check
          %p244 = pneg %p165
        $region38: #{tpu_custom_call.1} parent=11 // pred_check_branch
          %246 = sbr.rel (%p244) target = $region40
        $region39: #{tpu_custom_call.1} parent=11 // pred_region
          _
        $region40: #{tpu_custom_call.1} parent=11 // pred_fallthru
          _
      $region12: #{tpu_custom_call.1} parent=5 // pred_fallthru
        _
      %p247 = scmp.lt.s32.totalorder %s18, 2
      // Predicated region
      $region41: #{tpu_custom_call.1} parent=5 // pred_check
        %p248 = pneg %p247
      $region42: #{tpu_custom_call.1} parent=5 // pred_check_branch
        %250 = sbr.rel (%p248) target = $region44
      $region43: #{tpu_custom_call.1} parent=5 // pred_region
        _
      $region44: #{tpu_custom_call.1} parent=5 // pred_fallthru
        _
      %p251 = scmp.le.s32.totalorder 1, %s18
      %p252 = scmp.lt.s32.totalorder %s18, 3
      %p253 = pnand %p251, %p252
      %p254 = pneg %p253
      // Predicated region
      $region45: #{tpu_custom_call.1} parent=5 // pred_check
        _
      $region46: #{tpu_custom_call.1} parent=5 // pred_check_branch
        %256 = sbr.rel (%p253) target = $region48
      $region47: #{tpu_custom_call.1} parent=5 // pred_region
        %s257 = ssub.s32 %s18, 1
        // Predicated region
        $region49: #{tpu_custom_call.1} parent=47 // pred_check
          %p258 = pneg %p60
        $region50: #{tpu_custom_call.1} parent=47 // pred_check_branch
          %260 = sbr.rel (%p258) target = $region52
        $region51: #{tpu_custom_call.1} parent=47 // pred_region
          %261 = dma.done [#allocation3], 32768
        $region52: #{tpu_custom_call.1} parent=47 // pred_fallthru
          _
        // Predicated region
        $region53: #{tpu_custom_call.1} parent=47 // pred_check
          %p262 = pneg %p102
        $region54: #{tpu_custom_call.1} parent=47 // pred_check_branch
          %264 = sbr.rel (%p262) target = $region56
        $region55: #{tpu_custom_call.1} parent=47 // pred_region
          %265 = dma.done [#allocation6], 4096
        $region56: #{tpu_custom_call.1} parent=47 // pred_fallthru
          _
        %p266 = pneg %p39
        %p267 = pneg %p36
        %p268 = pneg %p60
        %p269 = pneg %p57
        %p270 = pneg %p81
        %p271 = pneg %p78
        %p272 = pneg %p102
        %p273 = pneg %p99
        %p274 = pneg %p123
        %p275 = pneg %p120
        %p276 = pneg %p144
        %p277 = pneg %p141
        %p278 = pneg %p165
        %p279 = pneg %p162
        %p280 = pneg %p191
        %p281 = pneg %p188
        %s282 = sand.u32 %s178, 1
        %s283 = scalar_lea.sflag [#allocation4], %s282
        %s284 = sand.u32 %s178, 1
        %s285 = smul.addr %s284, 8
        %s286 = scalar_lea.vmem [#allocation7], %s285
        %v287 = vld [vmem:[%s0] sm:$0xff]
        %v288 = vld [vmem:[%s0 + $0x8] sm:$0xff]
        %v289 = vld [vmem:[#allocation2] sm:$0xff]
        %v290 = vld [vmem:[#allocation2 + $0x8] sm:$0xff]
        %v291 = vld [vmem:[#allocation2 + $0x10] sm:$0xff]
        %v292 = vld [vmem:[#allocation2 + $0x18] sm:$0xff]
        %v293 = vld [vmem:[#allocation2 + $0x20] sm:$0xff]
        %v294 = vld [vmem:[#allocation2 + $0x28] sm:$0xff]
        %v295 = vld [vmem:[#allocation2 + $0x30] sm:$0xff]
        %v296 = vld [vmem:[#allocation2 + $0x38] sm:$0xff]
        %v297 = vld [vmem:[#allocation2 + $0x40] sm:$0xff]
        %v298 = vld [vmem:[#allocation2 + $0x48] sm:$0xff]
        %v299 = vld [vmem:[#allocation2 + $0x50] sm:$0xff]
        %v300 = vld [vmem:[#allocation2 + $0x58] sm:$0xff]
        %v301 = vld [vmem:[#allocation2 + $0x60] sm:$0xff]
        %v302 = vld [vmem:[#allocation2 + $0x68] sm:$0xff]
        %v303 = vld [vmem:[#allocation2 + $0x70] sm:$0xff]
        %v304 = vld [vmem:[#allocation2 + $0x78] sm:$0xff]
        %v305 = vld [vmem:[#allocation2 + $0x80] sm:$0xff]
        %v306 = vld [vmem:[#allocation2 + $0x88] sm:$0xff]
        %v307 = vld [vmem:[#allocation2 + $0x90] sm:$0xff]
        %v308 = vld [vmem:[#allocation2 + $0x98] sm:$0xff]
        %v309 = vld [vmem:[#allocation2 + $0xa0] sm:$0xff]
        %v310 = vld [vmem:[#allocation2 + $0xa8] sm:$0xff]
        %v311 = vld [vmem:[#allocation2 + $0xb0] sm:$0xff]
        %v312 = vld [vmem:[#allocation2 + $0xb8] sm:$0xff]
        %v313 = vld [vmem:[#allocation2 + $0xc0] sm:$0xff]
        %v314 = vld [vmem:[#allocation2 + $0xc8] sm:$0xff]
        %v315 = vld [vmem:[#allocation2 + $0xd0] sm:$0xff]
        %v316 = vld [vmem:[#allocation2 + $0xd8] sm:$0xff]
        %v317 = vld [vmem:[#allocation2 + $0xe0] sm:$0xff]
        %v318 = vld [vmem:[#allocation2 + $0xe8] sm:$0xff]
        %v319 = vld [vmem:[#allocation2 + $0xf0] sm:$0xff]
        %v320 = vld [vmem:[#allocation2 + $0xf8] sm:$0xff]
        %v321 = vld [vmem:[#allocation2 + $0x100] sm:$0xff]
        %v322 = vld [vmem:[#allocation2 + $0x108] sm:$0xff]
        %v323 = vld [vmem:[#allocation2 + $0x110] sm:$0xff]
        %v324 = vld [vmem:[#allocation2 + $0x118] sm:$0xff]
        %v325 = vld [vmem:[#allocation2 + $0x120] sm:$0xff]
        %v326 = vld [vmem:[#allocation2 + $0x128] sm:$0xff]
        %v327 = vld [vmem:[#allocation2 + $0x130] sm:$0xff]
        %v328 = vld [vmem:[#allocation2 + $0x138] sm:$0xff]
        %v329 = vld [vmem:[#allocation2 + $0x140] sm:$0xff]
        %v330 = vld [vmem:[#allocation2 + $0x148] sm:$0xff]
        %v331 = vld [vmem:[#allocation2 + $0x150] sm:$0xff]
        %v332 = vld [vmem:[#allocation2 + $0x158] sm:$0xff]
        %v333 = vld [vmem:[#allocation2 + $0x160] sm:$0xff]
        %v334 = vld [vmem:[#allocation2 + $0x168] sm:$0xff]
        %v335 = vld [vmem:[#allocation2 + $0x170] sm:$0xff]
        %v336 = vld [vmem:[#allocation2 + $0x178] sm:$0xff]
        %v337 = vld [vmem:[#allocation2 + $0x180] sm:$0xff]
        %v338 = vld [vmem:[#allocation2 + $0x188] sm:$0xff]
        %v339 = vld [vmem:[#allocation2 + $0x190] sm:$0xff]
        %v340 = vld [vmem:[#allocation2 + $0x198] sm:$0xff]
        %v341 = vld [vmem:[#allocation2 + $0x1a0] sm:$0xff]
        %v342 = vld [vmem:[#allocation2 + $0x1a8] sm:$0xff]
        %v343 = vld [vmem:[#allocation2 + $0x1b0] sm:$0xff]
        %v344 = vld [vmem:[#allocation2 + $0x1b8] sm:$0xff]
        %v345 = vld [vmem:[#allocation2 + $0x1c0] sm:$0xff]
        %v346 = vld [vmem:[#allocation2 + $0x1c8] sm:$0xff]
        %v347 = vld [vmem:[#allocation2 + $0x1d0] sm:$0xff]
        %v348 = vld [vmem:[#allocation2 + $0x1d8] sm:$0xff]
        %v349 = vld [vmem:[#allocation2 + $0x1e0] sm:$0xff]
        %v350 = vld [vmem:[#allocation2 + $0x1e8] sm:$0xff]
        %v351 = vld [vmem:[#allocation2 + $0x1f0] sm:$0xff]
        %v352 = vld [vmem:[#allocation2 + $0x1f8] sm:$0xff]
        %v353 = vld [vmem:[#allocation2 + $0x200] sm:$0xff]
        %v354 = vld [vmem:[#allocation2 + $0x208] sm:$0xff]
        %v355 = vld [vmem:[#allocation2 + $0x210] sm:$0xff]
        %v356 = vld [vmem:[#allocation2 + $0x218] sm:$0xff]
        %v357 = vld [vmem:[#allocation2 + $0x220] sm:$0xff]
        %v358 = vld [vmem:[#allocation2 + $0x228] sm:$0xff]
        %v359 = vld [vmem:[#allocation2 + $0x230] sm:$0xff]
        %v360 = vld [vmem:[#allocation2 + $0x238] sm:$0xff]
        %v361 = vld [vmem:[#allocation2 + $0x240] sm:$0xff]
        %v362 = vld [vmem:[#allocation2 + $0x248] sm:$0xff]
        %v363 = vld [vmem:[#allocation2 + $0x250] sm:$0xff]
        %v364 = vld [vmem:[#allocation2 + $0x258] sm:$0xff]
        %v365 = vld [vmem:[#allocation2 + $0x260] sm:$0xff]
        %v366 = vld [vmem:[#allocation2 + $0x268] sm:$0xff]
        %v367 = vld [vmem:[#allocation2 + $0x270] sm:$0xff]
        %v368 = vld [vmem:[#allocation2 + $0x278] sm:$0xff]
        %v369 = vld [vmem:[#allocation2 + $0x280] sm:$0xff]
        %v370 = vld [vmem:[#allocation2 + $0x288] sm:$0xff]
        %v371 = vld [vmem:[#allocation2 + $0x290] sm:$0xff]
        %v372 = vld [vmem:[#allocation2 + $0x298] sm:$0xff]
        %v373 = vld [vmem:[#allocation2 + $0x2a0] sm:$0xff]
        %v374 = vld [vmem:[#allocation2 + $0x2a8] sm:$0xff]
        %v375 = vld [vmem:[#allocation2 + $0x2b0] sm:$0xff]
        %v376 = vld [vmem:[#allocation2 + $0x2b8] sm:$0xff]
        %v377 = vld [vmem:[#allocation2 + $0x2c0] sm:$0xff]
        %v378 = vld [vmem:[#allocation2 + $0x2c8] sm:$0xff]
        %v379 = vld [vmem:[#allocation2 + $0x2d0] sm:$0xff]
        %v380 = vld [vmem:[#allocation2 + $0x2d8] sm:$0xff]
        %v381 = vld [vmem:[#allocation2 + $0x2e0] sm:$0xff]
        %v382 = vld [vmem:[#allocation2 + $0x2e8] sm:$0xff]
        %v383 = vld [vmem:[#allocation2 + $0x2f0] sm:$0xff]
        %v384 = vld [vmem:[#allocation2 + $0x2f8] sm:$0xff]
        %v385 = vld [vmem:[#allocation2 + $0x300] sm:$0xff]
        %v386 = vld [vmem:[#allocation2 + $0x308] sm:$0xff]
        %v387 = vld [vmem:[#allocation2 + $0x310] sm:$0xff]
        %v388 = vld [vmem:[#allocation2 + $0x318] sm:$0xff]
        %v389 = vld [vmem:[#allocation2 + $0x320] sm:$0xff]
        %v390 = vld [vmem:[#allocation2 + $0x328] sm:$0xff]
        %v391 = vld [vmem:[#allocation2 + $0x330] sm:$0xff]
        %v392 = vld [vmem:[#allocation2 + $0x338] sm:$0xff]
        %v393 = vld [vmem:[#allocation2 + $0x340] sm:$0xff]
        %v394 = vld [vmem:[#allocation2 + $0x348] sm:$0xff]
        %v395 = vld [vmem:[#allocation2 + $0x350] sm:$0xff]
        %v396 = vld [vmem:[#allocation2 + $0x358] sm:$0xff]
        %v397 = vld [vmem:[#allocation2 + $0x360] sm:$0xff]
        %v398 = vld [vmem:[#allocation2 + $0x368] sm:$0xff]
        %v399 = vld [vmem:[#allocation2 + $0x370] sm:$0xff]
        %v400 = vld [vmem:[#allocation2 + $0x378] sm:$0xff]
        %v401 = vld [vmem:[#allocation2 + $0x380] sm:$0xff]
        %v402 = vld [vmem:[#allocation2 + $0x388] sm:$0xff]
        %v403 = vld [vmem:[#allocation2 + $0x390] sm:$0xff]
        %v404 = vld [vmem:[#allocation2 + $0x398] sm:$0xff]
        %v405 = vld [vmem:[#allocation2 + $0x3a0] sm:$0xff]
        %v406 = vld [vmem:[#allocation2 + $0x3a8] sm:$0xff]
        %v407 = vld [vmem:[#allocation2 + $0x3b0] sm:$0xff]
        %v408 = vld [vmem:[#allocation2 + $0x3b8] sm:$0xff]
        %v409 = vld [vmem:[#allocation2 + $0x3c0] sm:$0xff]
        %v410 = vld [vmem:[#allocation2 + $0x3c8] sm:$0xff]
        %v411 = vld [vmem:[#allocation2 + $0x3d0] sm:$0xff]
        %v412 = vld [vmem:[#allocation2 + $0x3d8] sm:$0xff]
        %v413 = vld [vmem:[#allocation2 + $0x3e0] sm:$0xff]
        %v414 = vld [vmem:[#allocation2 + $0x3e8] sm:$0xff]
        %v415 = vld [vmem:[#allocation2 + $0x3f0] sm:$0xff]
        %v416 = vld [vmem:[#allocation2 + $0x3f8] sm:$0xff]
        %v417 = vld [vmem:[#allocation2 + $0x400] sm:$0xff]
        %v418 = vld [vmem:[#allocation2 + $0x408] sm:$0xff]
        %v419 = vld [vmem:[#allocation2 + $0x410] sm:$0xff]
        %v420 = vld [vmem:[#allocation2 + $0x418] sm:$0xff]
        %v421 = vld [vmem:[#allocation2 + $0x420] sm:$0xff]
        %v422 = vld [vmem:[#allocation2 + $0x428] sm:$0xff]
        %v423 = vld [vmem:[#allocation2 + $0x430] sm:$0xff]
        %v424 = vld [vmem:[#allocation2 + $0x438] sm:$0xff]
        %v425 = vld [vmem:[#allocation2 + $0x440] sm:$0xff]
        %v426 = vld [vmem:[#allocation2 + $0x448] sm:$0xff]
        %v427 = vld [vmem:[#allocation2 + $0x450] sm:$0xff]
        %v428 = vld [vmem:[#allocation2 + $0x458] sm:$0xff]
        %v429 = vld [vmem:[#allocation2 + $0x460] sm:$0xff]
        %v430 = vld [vmem:[#allocation2 + $0x468] sm:$0xff]
        %v431 = vld [vmem:[#allocation2 + $0x470] sm:$0xff]
        %v432 = vld [vmem:[#allocation2 + $0x478] sm:$0xff]
        %v433 = vld [vmem:[#allocation2 + $0x480] sm:$0xff]
        %v434 = vld [vmem:[#allocation2 + $0x488] sm:$0xff]
        %v435 = vld [vmem:[#allocation2 + $0x490] sm:$0xff]
        %v436 = vld [vmem:[#allocation2 + $0x498] sm:$0xff]
        %v437 = vld [vmem:[#allocation2 + $0x4a0] sm:$0xff]
        %v438 = vld [vmem:[#allocation2 + $0x4a8] sm:$0xff]
        %v439 = vld [vmem:[#allocation2 + $0x4b0] sm:$0xff]
        %v440 = vld [vmem:[#allocation2 + $0x4b8] sm:$0xff]
        %v441 = vld [vmem:[#allocation2 + $0x4c0] sm:$0xff]
        %v442 = vld [vmem:[#allocation2 + $0x4c8] sm:$0xff]
        %v443 = vld [vmem:[#allocation2 + $0x4d0] sm:$0xff]
        %v444 = vld [vmem:[#allocation2 + $0x4d8] sm:$0xff]
        %v445 = vld [vmem:[#allocation2 + $0x4e0] sm:$0xff]
        %v446 = vld [vmem:[#allocation2 + $0x4e8] sm:$0xff]
        %v447 = vld [vmem:[#allocation2 + $0x4f0] sm:$0xff]
        %v448 = vld [vmem:[#allocation2 + $0x4f8] sm:$0xff]
        %v449 = vld [vmem:[#allocation2 + $0x500] sm:$0xff]
        %v450 = vld [vmem:[#allocation2 + $0x508] sm:$0xff]
        %v451 = vld [vmem:[#allocation2 + $0x510] sm:$0xff]
        %v452 = vld [vmem:[#allocation2 + $0x518] sm:$0xff]
        %v453 = vld [vmem:[#allocation2 + $0x520] sm:$0xff]
        %v454 = vld [vmem:[#allocation2 + $0x528] sm:$0xff]
        %v455 = vld [vmem:[#allocation2 + $0x530] sm:$0xff]
        %v456 = vld [vmem:[#allocation2 + $0x538] sm:$0xff]
        %v457 = vld [vmem:[#allocation2 + $0x540] sm:$0xff]
        %v458 = vld [vmem:[#allocation2 + $0x548] sm:$0xff]
        %v459 = vld [vmem:[#allocation2 + $0x550] sm:$0xff]
        %v460 = vld [vmem:[#allocation2 + $0x558] sm:$0xff]
        %v461 = vld [vmem:[#allocation2 + $0x560] sm:$0xff]
        %v462 = vld [vmem:[#allocation2 + $0x568] sm:$0xff]
        %v463 = vld [vmem:[#allocation2 + $0x570] sm:$0xff]
        %v464 = vld [vmem:[#allocation2 + $0x578] sm:$0xff]
        %v465 = vld [vmem:[#allocation2 + $0x580] sm:$0xff]
        %v466 = vld [vmem:[#allocation2 + $0x588] sm:$0xff]
        %v467 = vld [vmem:[#allocation2 + $0x590] sm:$0xff]
        %v468 = vld [vmem:[#allocation2 + $0x598] sm:$0xff]
        %v469 = vld [vmem:[#allocation2 + $0x5a0] sm:$0xff]
        %v470 = vld [vmem:[#allocation2 + $0x5a8] sm:$0xff]
        %v471 = vld [vmem:[#allocation2 + $0x5b0] sm:$0xff]
        %v472 = vld [vmem:[#allocation2 + $0x5b8] sm:$0xff]
        %v473 = vld [vmem:[#allocation2 + $0x5c0] sm:$0xff]
        %v474 = vld [vmem:[#allocation2 + $0x5c8] sm:$0xff]
        %v475 = vld [vmem:[#allocation2 + $0x5d0] sm:$0xff]
        %v476 = vld [vmem:[#allocation2 + $0x5d8] sm:$0xff]
        %v477 = vld [vmem:[#allocation2 + $0x5e0] sm:$0xff]
        %v478 = vld [vmem:[#allocation2 + $0x5e8] sm:$0xff]
        %v479 = vld [vmem:[#allocation2 + $0x5f0] sm:$0xff]
        %v480 = vld [vmem:[#allocation2 + $0x5f8] sm:$0xff]
        %v481 = vld [vmem:[#allocation2 + $0x600] sm:$0xff]
        %v482 = vld [vmem:[#allocation2 + $0x608] sm:$0xff]
        %v483 = vld [vmem:[#allocation2 + $0x610] sm:$0xff]
        %v484 = vld [vmem:[#allocation2 + $0x618] sm:$0xff]
        %v485 = vld [vmem:[#allocation2 + $0x620] sm:$0xff]
        %v486 = vld [vmem:[#allocation2 + $0x628] sm:$0xff]
        %v487 = vld [vmem:[#allocation2 + $0x630] sm:$0xff]
        %v488 = vld [vmem:[#allocation2 + $0x638] sm:$0xff]
        %v489 = vld [vmem:[#allocation2 + $0x640] sm:$0xff]
        %v490 = vld [vmem:[#allocation2 + $0x648] sm:$0xff]
        %v491 = vld [vmem:[#allocation2 + $0x650] sm:$0xff]
        %v492 = vld [vmem:[#allocation2 + $0x658] sm:$0xff]
        %v493 = vld [vmem:[#allocation2 + $0x660] sm:$0xff]
        %v494 = vld [vmem:[#allocation2 + $0x668] sm:$0xff]
        %v495 = vld [vmem:[#allocation2 + $0x670] sm:$0xff]
        %v496 = vld [vmem:[#allocation2 + $0x678] sm:$0xff]
        %v497 = vld [vmem:[#allocation2 + $0x680] sm:$0xff]
        %v498 = vld [vmem:[#allocation2 + $0x688] sm:$0xff]
        %v499 = vld [vmem:[#allocation2 + $0x690] sm:$0xff]
        %v500 = vld [vmem:[#allocation2 + $0x698] sm:$0xff]
        %v501 = vld [vmem:[#allocation2 + $0x6a0] sm:$0xff]
        %v502 = vld [vmem:[#allocation2 + $0x6a8] sm:$0xff]
        %v503 = vld [vmem:[#allocation2 + $0x6b0] sm:$0xff]
        %v504 = vld [vmem:[#allocation2 + $0x6b8] sm:$0xff]
        %v505 = vld [vmem:[#allocation2 + $0x6c0] sm:$0xff]
        %v506 = vld [vmem:[#allocation2 + $0x6c8] sm:$0xff]
        %v507 = vld [vmem:[#allocation2 + $0x6d0] sm:$0xff]
        %v508 = vld [vmem:[#allocation2 + $0x6d8] sm:$0xff]
        %v509 = vld [vmem:[#allocation2 + $0x6e0] sm:$0xff]
        %v510 = vld [vmem:[#allocation2 + $0x6e8] sm:$0xff]
        %v511 = vld [vmem:[#allocation2 + $0x6f0] sm:$0xff]
        %v512 = vld [vmem:[#allocation2 + $0x6f8] sm:$0xff]
        %v513 = vld [vmem:[#allocation2 + $0x700] sm:$0xff]
        %v514 = vld [vmem:[#allocation2 + $0x708] sm:$0xff]
        %v515 = vld [vmem:[#allocation2 + $0x710] sm:$0xff]
        %v516 = vld [vmem:[#allocation2 + $0x718] sm:$0xff]
        %v517 = vld [vmem:[#allocation2 + $0x720] sm:$0xff]
        %v518 = vld [vmem:[#allocation2 + $0x728] sm:$0xff]
        %v519 = vld [vmem:[#allocation2 + $0x730] sm:$0xff]
        %v520 = vld [vmem:[#allocation2 + $0x738] sm:$0xff]
        %v521 = vld [vmem:[#allocation2 + $0x740] sm:$0xff]
        %v522 = vld [vmem:[#allocation2 + $0x748] sm:$0xff]
        %v523 = vld [vmem:[#allocation2 + $0x750] sm:$0xff]
        %v524 = vld [vmem:[#allocation2 + $0x758] sm:$0xff]
        %v525 = vld [vmem:[#allocation2 + $0x760] sm:$0xff]
        %v526 = vld [vmem:[#allocation2 + $0x768] sm:$0xff]
        %v527 = vld [vmem:[#allocation2 + $0x770] sm:$0xff]
        %v528 = vld [vmem:[#allocation2 + $0x778] sm:$0xff]
        %v529 = vld [vmem:[#allocation2 + $0x780] sm:$0xff]
        %v530 = vld [vmem:[#allocation2 + $0x788] sm:$0xff]
        %v531 = vld [vmem:[#allocation2 + $0x790] sm:$0xff]
        %v532 = vld [vmem:[#allocation2 + $0x798] sm:$0xff]
        %v533 = vld [vmem:[#allocation2 + $0x7a0] sm:$0xff]
        %v534 = vld [vmem:[#allocation2 + $0x7a8] sm:$0xff]
        %v535 = vld [vmem:[#allocation2 + $0x7b0] sm:$0xff]
        %v536 = vld [vmem:[#allocation2 + $0x7b8] sm:$0xff]
        %v537 = vld [vmem:[#allocation2 + $0x7c0] sm:$0xff]
        %v538 = vld [vmem:[#allocation2 + $0x7c8] sm:$0xff]
        %v539 = vld [vmem:[#allocation2 + $0x7d0] sm:$0xff]
        %v540 = vld [vmem:[#allocation2 + $0x7d8] sm:$0xff]
        %v541 = vld [vmem:[#allocation2 + $0x7e0] sm:$0xff]
        %v542 = vld [vmem:[#allocation2 + $0x7e8] sm:$0xff]
        %v543 = vld [vmem:[#allocation2 + $0x7f0] sm:$0xff]
        %v544 = vld [vmem:[#allocation2 + $0x7f8] sm:$0xff]
        %v545 = vld [vmem:[%s2] sm:$0x3]
        %v547 = vlaneseq
        %v548 = vshrl.u32 %v547, 7
        %v549 = vsub.s32 0, %v548
        %v550 = vrot.slane %v545, %v549
        %v551 = vlaneseq
        %v552 = vshrl.u32 %v551, 7
        %v553 = vsub.s32 1, %v552
        %v554 = vrot.slane %v545, %v553
        %v559 = vcombine.high %v287, %v287
        %v561 = vunpack.c.l.s4 1983009808
        %v562 = vunpack.c.0.s8 %v561
        %v563 = vlaneseq
        %v564 = vshrl.u32 %v563, 7
        %v565 = vsub.s32 %v562, %v564
        %v566 = vrot.slane %v287, %v565
        %v568 = vunpack.c.l.s4 1983009808
        %v569 = vunpack.c.0.s8 %v568
        %v570 = vlaneseq
        %v571 = vshrl.u32 %v570, 7
        %v572 = vsub.s32 %v569, %v571
        %v573 = vrot.slane %v559, %v572
        %v574 = vcombine.high %v566, %v566
        %v575 = vcombine.high %v573, %v573
        %v576 = vcombine.high %v288, %v288
        %v578 = vunpack.c.l.s4 1983009808
        %v579 = vunpack.c.0.s8 %v578
        %v580 = vlaneseq
        %v581 = vshrl.u32 %v580, 7
        %v582 = vsub.s32 %v579, %v581
        %v583 = vrot.slane %v288, %v582
        %v585 = vunpack.c.l.s4 1983009808
        %v586 = vunpack.c.0.s8 %v585
        %v587 = vlaneseq
        %v588 = vshrl.u32 %v587, 7
        %v589 = vsub.s32 %v586, %v588
        %v590 = vrot.slane %v576, %v589
        %v591 = vcombine.high %v583, %v583
        %v592 = vcombine.high %v590, %v590
        %601 = vmatprep.subr.mxu0 %v320
        %602 = vmatpush1.msra.mxu0 %v319
        %603 = vmatprep.subr.mxu0 %v318
        %604 = vmatpush1.msra.mxu0 %v317
        %605 = vmatprep.subr.mxu0 %v316
        %606 = vmatpush1.msra.mxu0 %v315
        %607 = vmatprep.subr.mxu0 %v314
        %608 = vmatpush1.msra.mxu0 %v313
        %609 = vmatprep.subr.mxu0 %v312
        %610 = vmatpush1.msra.mxu0 %v311
        %611 = vmatprep.subr.mxu0 %v310
        %612 = vmatpush1.msra.mxu0 %v309
        %613 = vmatprep.subr.mxu0 %v308
        %614 = vmatpush1.msra.mxu0 %v307
        %615 = vmatprep.subr.mxu0 %v306
        %616 = vmatpush1.msra.mxu0 %v305
        %617 = vmatprep.subr.mxu0 %v304
        %618 = vmatpush1.msra.mxu0 %v303
        %619 = vmatprep.subr.mxu0 %v302
        %620 = vmatpush1.msra.mxu0 %v301
        %621 = vmatprep.subr.mxu0 %v300
        %622 = vmatpush1.msra.mxu0 %v299
        %623 = vmatprep.subr.mxu0 %v298
        %624 = vmatpush1.msra.mxu0 %v297
        %625 = vmatprep.subr.mxu0 %v296
        %626 = vmatpush1.msra.mxu0 %v295
        %627 = vmatprep.subr.mxu0 %v294
        %628 = vmatpush1.msra.mxu0 %v293
        %629 = vmatprep.subr.mxu0 %v292
        %630 = vmatpush1.msra.mxu0 %v291
        %631 = vmatprep.subr.mxu0 %v290
        %632 = vmatpush1.msra.mxu0 %v289
        %633 = vmatprep.subr.mxu0 %v352
        %634 = vmatpush2.msra.mxu0 %v351
        %635 = vmatprep.subr.mxu0 %v350
        %636 = vmatpush2.msra.mxu0 %v349
        %637 = vmatprep.subr.mxu0 %v348
        %638 = vmatpush2.msra.mxu0 %v347
        %639 = vmatprep.subr.mxu0 %v346
        %640 = vmatpush2.msra.mxu0 %v345
        %641 = vmatprep.subr.mxu0 %v344
        %642 = vmatpush2.msra.mxu0 %v343
        %643 = vmatprep.subr.mxu0 %v342
        %644 = vmatpush2.msra.mxu0 %v341
        %645 = vmatprep.subr.mxu0 %v340
        %646 = vmatpush2.msra.mxu0 %v339
        %647 = vmatprep.subr.mxu0 %v338
        %648 = vmatpush2.msra.mxu0 %v337
        %649 = vmatprep.subr.mxu0 %v336
        %650 = vmatpush2.msra.mxu0 %v335
        %651 = vmatprep.subr.mxu0 %v334
        %652 = vmatpush2.msra.mxu0 %v333
        %653 = vmatprep.subr.mxu0 %v332
        %654 = vmatpush2.msra.mxu0 %v331
        %655 = vmatprep.subr.mxu0 %v330
        %656 = vmatpush2.msra.mxu0 %v329
        %657 = vmatprep.subr.mxu0 %v328
        %658 = vmatpush2.msra.mxu0 %v327
        %659 = vmatprep.subr.mxu0 %v326
        %660 = vmatpush2.msra.mxu0 %v325
        %661 = vmatprep.subr.mxu0 %v324
        %662 = vmatpush2.msra.mxu0 %v323
        %663 = vmatprep.subr.mxu0 %v322
        %664 = vmatpush2.msra.mxu0 %v321
        %665 = vmatprep.mubr.f32.mxu0 %v574
        %666 = vmatmul.mubr.f32.gmra.mxu0 %v566
        %v667 = vpop.f32.mrf.mxu0
        %v668 = vadd.f32 %v550, %v667
        %v669 = vpop.f32.mrf.mxu0
        %v670 = vadd.f32 %v554, %v669
        %671 = vdwg.mxu0
        %672 = vmatprep.subr.mxu0 %v384
        %673 = vmatpush1.msra.mxu0 %v383
        %674 = vmatprep.subr.mxu0 %v382
        %675 = vmatpush1.msra.mxu0 %v381
        %676 = vmatprep.subr.mxu0 %v380
        %677 = vmatpush1.msra.mxu0 %v379
        %678 = vmatprep.subr.mxu0 %v378
        %679 = vmatpush1.msra.mxu0 %v377
        %680 = vmatprep.subr.mxu0 %v376
        %681 = vmatpush1.msra.mxu0 %v375
        %682 = vmatprep.subr.mxu0 %v374
        %683 = vmatpush1.msra.mxu0 %v373
        %684 = vmatprep.subr.mxu0 %v372
        %685 = vmatpush1.msra.mxu0 %v371
        %686 = vmatprep.subr.mxu0 %v370
        %687 = vmatpush1.msra.mxu0 %v369
        %688 = vmatprep.subr.mxu0 %v368
        %689 = vmatpush1.msra.mxu0 %v367
        %690 = vmatprep.subr.mxu0 %v366
        %691 = vmatpush1.msra.mxu0 %v365
        %692 = vmatprep.subr.mxu0 %v364
        %693 = vmatpush1.msra.mxu0 %v363
        %694 = vmatprep.subr.mxu0 %v362
        %695 = vmatpush1.msra.mxu0 %v361
        %696 = vmatprep.subr.mxu0 %v360
        %697 = vmatpush1.msra.mxu0 %v359
        %698 = vmatprep.subr.mxu0 %v358
        %699 = vmatpush1.msra.mxu0 %v357
        %700 = vmatprep.subr.mxu0 %v356
        %701 = vmatpush1.msra.mxu0 %v355
        %702 = vmatprep.subr.mxu0 %v354
        %703 = vmatpush1.msra.mxu0 %v353
        %704 = vmatprep.subr.mxu0 %v416
        %705 = vmatpush2.msra.mxu0 %v415
        %706 = vmatprep.subr.mxu0 %v414
        %707 = vmatpush2.msra.mxu0 %v413
        %708 = vmatprep.subr.mxu0 %v412
        %709 = vmatpush2.msra.mxu0 %v411
        %710 = vmatprep.subr.mxu0 %v410
        %711 = vmatpush2.msra.mxu0 %v409
        %712 = vmatprep.subr.mxu0 %v408
        %713 = vmatpush2.msra.mxu0 %v407
        %714 = vmatprep.subr.mxu0 %v406
        %715 = vmatpush2.msra.mxu0 %v405
        %716 = vmatprep.subr.mxu0 %v404
        %717 = vmatpush2.msra.mxu0 %v403
        %718 = vmatprep.subr.mxu0 %v402
        %719 = vmatpush2.msra.mxu0 %v401
        %720 = vmatprep.subr.mxu0 %v400
        %721 = vmatpush2.msra.mxu0 %v399
        %722 = vmatprep.subr.mxu0 %v398
        %723 = vmatpush2.msra.mxu0 %v397
        %724 = vmatprep.subr.mxu0 %v396
        %725 = vmatpush2.msra.mxu0 %v395
        %726 = vmatprep.subr.mxu0 %v394
        %727 = vmatpush2.msra.mxu0 %v393
        %728 = vmatprep.subr.mxu0 %v392
        %729 = vmatpush2.msra.mxu0 %v391
        %730 = vmatprep.subr.mxu0 %v390
        %731 = vmatpush2.msra.mxu0 %v389
        %732 = vmatprep.subr.mxu0 %v388
        %733 = vmatpush2.msra.mxu0 %v387
        %734 = vmatprep.subr.mxu0 %v386
        %735 = vmatpush2.msra.mxu0 %v385
        %736 = vmatprep.mubr.f32.mxu0 %v575
        %737 = vmatmul.mubr.f32.gmra.mxu0 %v573
        %v738 = vpop.f32.mrf.mxu0
        %v739 = vadd.f32 %v668, %v738
        %v740 = vpop.f32.mrf.mxu0
        %v741 = vadd.f32 %v670, %v740
        %742 = vdwg.mxu0
        %743 = vmatprep.subr.mxu0 %v448
        %744 = vmatpush1.msra.mxu0 %v447
        %745 = vmatprep.subr.mxu0 %v446
        %746 = vmatpush1.msra.mxu0 %v445
        %747 = vmatprep.subr.mxu0 %v444
        %748 = vmatpush1.msra.mxu0 %v443
        %749 = vmatprep.subr.mxu0 %v442
        %750 = vmatpush1.msra.mxu0 %v441
        %751 = vmatprep.subr.mxu0 %v440
        %752 = vmatpush1.msra.mxu0 %v439
        %753 = vmatprep.subr.mxu0 %v438
        %754 = vmatpush1.msra.mxu0 %v437
        %755 = vmatprep.subr.mxu0 %v436
        %756 = vmatpush1.msra.mxu0 %v435
        %757 = vmatprep.subr.mxu0 %v434
        %758 = vmatpush1.msra.mxu0 %v433
        %759 = vmatprep.subr.mxu0 %v432
        %760 = vmatpush1.msra.mxu0 %v431
        %761 = vmatprep.subr.mxu0 %v430
        %762 = vmatpush1.msra.mxu0 %v429
        %763 = vmatprep.subr.mxu0 %v428
        %764 = vmatpush1.msra.mxu0 %v427
        %765 = vmatprep.subr.mxu0 %v426
        %766 = vmatpush1.msra.mxu0 %v425
        %767 = vmatprep.subr.mxu0 %v424
        %768 = vmatpush1.msra.mxu0 %v423
        %769 = vmatprep.subr.mxu0 %v422
        %770 = vmatpush1.msra.mxu0 %v421
        %771 = vmatprep.subr.mxu0 %v420
        %772 = vmatpush1.msra.mxu0 %v419
        %773 = vmatprep.subr.mxu0 %v418
        %774 = vmatpush1.msra.mxu0 %v417
        %775 = vmatprep.subr.mxu0 %v480
        %776 = vmatpush2.msra.mxu0 %v479
        %777 = vmatprep.subr.mxu0 %v478
        %778 = vmatpush2.msra.mxu0 %v477
        %779 = vmatprep.subr.mxu0 %v476
        %780 = vmatpush2.msra.mxu0 %v475
        %781 = vmatprep.subr.mxu0 %v474
        %782 = vmatpush2.msra.mxu0 %v473
        %783 = vmatprep.subr.mxu0 %v472
        %784 = vmatpush2.msra.mxu0 %v471
        %785 = vmatprep.subr.mxu0 %v470
        %786 = vmatpush2.msra.mxu0 %v469
        %787 = vmatprep.subr.mxu0 %v468
        %788 = vmatpush2.msra.mxu0 %v467
        %789 = vmatprep.subr.mxu0 %v466
        %790 = vmatpush2.msra.mxu0 %v465
        %791 = vmatprep.subr.mxu0 %v464
        %792 = vmatpush2.msra.mxu0 %v463
        %793 = vmatprep.subr.mxu0 %v462
        %794 = vmatpush2.msra.mxu0 %v461
        %795 = vmatprep.subr.mxu0 %v460
        %796 = vmatpush2.msra.mxu0 %v459
        %797 = vmatprep.subr.mxu0 %v458
        %798 = vmatpush2.msra.mxu0 %v457
        %799 = vmatprep.subr.mxu0 %v456
        %800 = vmatpush2.msra.mxu0 %v455
        %801 = vmatprep.subr.mxu0 %v454
        %802 = vmatpush2.msra.mxu0 %v453
        %803 = vmatprep.subr.mxu0 %v452
        %804 = vmatpush2.msra.mxu0 %v451
        %805 = vmatprep.subr.mxu0 %v450
        %806 = vmatpush2.msra.mxu0 %v449
        %807 = vmatprep.mubr.f32.mxu0 %v591
        %808 = vmatmul.mubr.f32.gmra.mxu0 %v583
        %v809 = vpop.f32.mrf.mxu0
        %v810 = vadd.f32 %v739, %v809
        %v811 = vpop.f32.mrf.mxu0
        %v812 = vadd.f32 %v741, %v811
        %813 = vdwg.mxu0
        %814 = vmatprep.subr.mxu0 %v512
        %815 = vmatpush1.msra.mxu0 %v511
        %816 = vmatprep.subr.mxu0 %v510
        %817 = vmatpush1.msra.mxu0 %v509
        %818 = vmatprep.subr.mxu0 %v508
        %819 = vmatpush1.msra.mxu0 %v507
        %820 = vmatprep.subr.mxu0 %v506
        %821 = vmatpush1.msra.mxu0 %v505
        %822 = vmatprep.subr.mxu0 %v504
        %823 = vmatpush1.msra.mxu0 %v503
        %824 = vmatprep.subr.mxu0 %v502
        %825 = vmatpush1.msra.mxu0 %v501
        %826 = vmatprep.subr.mxu0 %v500
        %827 = vmatpush1.msra.mxu0 %v499
        %828 = vmatprep.subr.mxu0 %v498
        %829 = vmatpush1.msra.mxu0 %v497
        %830 = vmatprep.subr.mxu0 %v496
        %831 = vmatpush1.msra.mxu0 %v495
        %832 = vmatprep.subr.mxu0 %v494
        %833 = vmatpush1.msra.mxu0 %v493
        %834 = vmatprep.subr.mxu0 %v492
        %835 = vmatpush1.msra.mxu0 %v491
        %836 = vmatprep.subr.mxu0 %v490
        %837 = vmatpush1.msra.mxu0 %v489
        %838 = vmatprep.subr.mxu0 %v488
        %839 = vmatpush1.msra.mxu0 %v487
        %840 = vmatprep.subr.mxu0 %v486
        %841 = vmatpush1.msra.mxu0 %v485
        %842 = vmatprep.subr.mxu0 %v484
        %843 = vmatpush1.msra.mxu0 %v483
        %844 = vmatprep.subr.mxu0 %v482
        %845 = vmatpush1.msra.mxu0 %v481
        %846 = vmatprep.subr.mxu0 %v544
        %847 = vmatpush2.msra.mxu0 %v543
        %848 = vmatprep.subr.mxu0 %v542
        %849 = vmatpush2.msra.mxu0 %v541
        %850 = vmatprep.subr.mxu0 %v540
        %851 = vmatpush2.msra.mxu0 %v539
        %852 = vmatprep.subr.mxu0 %v538
        %853 = vmatpush2.msra.mxu0 %v537
        %854 = vmatprep.subr.mxu0 %v536
        %855 = vmatpush2.msra.mxu0 %v535
        %856 = vmatprep.subr.mxu0 %v534
        %857 = vmatpush2.msra.mxu0 %v533
        %858 = vmatprep.subr.mxu0 %v532
        %859 = vmatpush2.msra.mxu0 %v531
        %860 = vmatprep.subr.mxu0 %v530
        %861 = vmatpush2.msra.mxu0 %v529
        %862 = vmatprep.subr.mxu0 %v528
        %863 = vmatpush2.msra.mxu0 %v527
        %864 = vmatprep.subr.mxu0 %v526
        %865 = vmatpush2.msra.mxu0 %v525
        %866 = vmatprep.subr.mxu0 %v524
        %867 = vmatpush2.msra.mxu0 %v523
        %868 = vmatprep.subr.mxu0 %v522
        %869 = vmatpush2.msra.mxu0 %v521
        %870 = vmatprep.subr.mxu0 %v520
        %871 = vmatpush2.msra.mxu0 %v519
        %872 = vmatprep.subr.mxu0 %v518
        %873 = vmatpush2.msra.mxu0 %v517
        %874 = vmatprep.subr.mxu0 %v516
        %875 = vmatpush2.msra.mxu0 %v515
        %876 = vmatprep.subr.mxu0 %v514
        %877 = vmatpush2.msra.mxu0 %v513
        %878 = vmatprep.mubr.f32.mxu0 %v592
        %879 = vmatmul.mubr.f32.gmra.mxu0 %v590
        %v880 = vpop.f32.mrf.mxu0
        %v881 = vadd.f32 %v810, %v880
        %v882 = vpop.f32.mrf.mxu0
        %v883 = vadd.f32 %v812, %v882
        %884 = vdwg.mxu0
        %v885 = vmax.f32 %v881, 0.0
        %v886 = vmax.f32 %v883, 0.0
        %v887 = vld [vmem:[#allocation5] sm:$0xff]
        %v888 = vld [vmem:[#allocation5 + $0x8] sm:$0xff]
        %v889 = vld [vmem:[#allocation5 + $0x10] sm:$0xff]
        %v890 = vld [vmem:[#allocation5 + $0x18] sm:$0xff]
        %v891 = vld [vmem:[#allocation5 + $0x20] sm:$0xff]
        %v892 = vld [vmem:[#allocation5 + $0x28] sm:$0xff]
        %v893 = vld [vmem:[#allocation5 + $0x30] sm:$0xff]
        %v894 = vld [vmem:[#allocation5 + $0x38] sm:$0xff]
        %v895 = vld [vmem:[#allocation5 + $0x40] sm:$0xff]
        %v896 = vld [vmem:[#allocation5 + $0x48] sm:$0xff]
        %v897 = vld [vmem:[#allocation5 + $0x50] sm:$0xff]
        %v898 = vld [vmem:[#allocation5 + $0x58] sm:$0xff]
        %v899 = vld [vmem:[#allocation5 + $0x60] sm:$0xff]
        %v900 = vld [vmem:[#allocation5 + $0x68] sm:$0xff]
        %v901 = vld [vmem:[#allocation5 + $0x70] sm:$0xff]
        %v902 = vld [vmem:[#allocation5 + $0x78] sm:$0xff]
        %v903 = vld [vmem:[#allocation5 + $0x80] sm:$0xff]
        %v904 = vld [vmem:[#allocation5 + $0x88] sm:$0xff]
        %v905 = vld [vmem:[#allocation5 + $0x90] sm:$0xff]
        %v906 = vld [vmem:[#allocation5 + $0x98] sm:$0xff]
        %v907 = vld [vmem:[#allocation5 + $0xa0] sm:$0xff]
        %v908 = vld [vmem:[#allocation5 + $0xa8] sm:$0xff]
        %v909 = vld [vmem:[#allocation5 + $0xb0] sm:$0xff]
        %v910 = vld [vmem:[#allocation5 + $0xb8] sm:$0xff]
        %v911 = vld [vmem:[#allocation5 + $0xc0] sm:$0xff]
        %v912 = vld [vmem:[#allocation5 + $0xc8] sm:$0xff]
        %v913 = vld [vmem:[#allocation5 + $0xd0] sm:$0xff]
        %v914 = vld [vmem:[#allocation5 + $0xd8] sm:$0xff]
        %v915 = vld [vmem:[#allocation5 + $0xe0] sm:$0xff]
        %v916 = vld [vmem:[#allocation5 + $0xe8] sm:$0xff]
        %v917 = vld [vmem:[#allocation5 + $0xf0] sm:$0xff]
        %v918 = vld [vmem:[#allocation5 + $0xf8] sm:$0xff]
        %v919 = vld [vmem:[%s4] sm:$0x1]
        %v921 = vlaneseq
        %v922 = vshrl.u32 %v921, 7
        %v923 = vsub.s32 0, %v922
        %v924 = vrot.slane %v919, %v923
        %926 = vmatprep.subr.mxu0 0.0
        %927 = vmatpush1.msra.mxu0 %v902
        %928 = vmatprep.subr.mxu0 0.0
        %929 = vmatpush1.msra.mxu0 %v901
        %930 = vmatprep.subr.mxu0 0.0
        %931 = vmatpush1.msra.mxu0 %v900
        %932 = vmatprep.subr.mxu0 0.0
        %933 = vmatpush1.msra.mxu0 %v899
        %934 = vmatprep.subr.mxu0 0.0
        %935 = vmatpush1.msra.mxu0 %v898
        %936 = vmatprep.subr.mxu0 0.0
        %937 = vmatpush1.msra.mxu0 %v897
        %938 = vmatprep.subr.mxu0 0.0
        %939 = vmatpush1.msra.mxu0 %v896
        %940 = vmatprep.subr.mxu0 0.0
        %941 = vmatpush1.msra.mxu0 %v895
        %942 = vmatprep.subr.mxu0 0.0
        %943 = vmatpush1.msra.mxu0 %v894
        %944 = vmatprep.subr.mxu0 0.0
        %945 = vmatpush1.msra.mxu0 %v893
        %946 = vmatprep.subr.mxu0 0.0
        %947 = vmatpush1.msra.mxu0 %v892
        %948 = vmatprep.subr.mxu0 0.0
        %949 = vmatpush1.msra.mxu0 %v891
        %950 = vmatprep.subr.mxu0 0.0
        %951 = vmatpush1.msra.mxu0 %v890
        %952 = vmatprep.subr.mxu0 0.0
        %953 = vmatpush1.msra.mxu0 %v889
        %954 = vmatprep.subr.mxu0 0.0
        %955 = vmatpush1.msra.mxu0 %v888
        %956 = vmatprep.subr.mxu0 0.0
        %957 = vmatpush1.msra.mxu0 %v887
        %958 = vmatprep.subr.mxu0 0.0
        %959 = vmatpush2.msra.mxu0 %v918
        %960 = vmatprep.subr.mxu0 0.0
        %961 = vmatpush2.msra.mxu0 %v917
        %962 = vmatprep.subr.mxu0 0.0
        %963 = vmatpush2.msra.mxu0 %v916
        %964 = vmatprep.subr.mxu0 0.0
        %965 = vmatpush2.msra.mxu0 %v915
        %966 = vmatprep.subr.mxu0 0.0
        %967 = vmatpush2.msra.mxu0 %v914
        %968 = vmatprep.subr.mxu0 0.0
        %969 = vmatpush2.msra.mxu0 %v913
        %970 = vmatprep.subr.mxu0 0.0
        %971 = vmatpush2.msra.mxu0 %v912
        %972 = vmatprep.subr.mxu0 0.0
        %973 = vmatpush2.msra.mxu0 %v911
        %974 = vmatprep.subr.mxu0 0.0
        %975 = vmatpush2.msra.mxu0 %v910
        %976 = vmatprep.subr.mxu0 0.0
        %977 = vmatpush2.msra.mxu0 %v909
        %978 = vmatprep.subr.mxu0 0.0
        %979 = vmatpush2.msra.mxu0 %v908
        %980 = vmatprep.subr.mxu0 0.0
        %981 = vmatpush2.msra.mxu0 %v907
        %982 = vmatprep.subr.mxu0 0.0
        %983 = vmatpush2.msra.mxu0 %v906
        %984 = vmatprep.subr.mxu0 0.0
        %985 = vmatpush2.msra.mxu0 %v905
        %986 = vmatprep.subr.mxu0 0.0
        %987 = vmatpush2.msra.mxu0 %v904
        %988 = vmatprep.subr.mxu0 0.0
        %989 = vmatpush2.msra.mxu0 %v903
        %990 = vmatprep.mubr.f32.mxu0 %v886
        %991 = vmatmul.mubr.f32.gmra.mxu0 %v885
        %v992 = vpop.f32.mrf.mxu0
        %v993 = vadd.f32 %v924, %v992
        %v994 = vpop.f32.mrf.mxu0
        %995 = vdwg.mxu0
        %v996 = vmax.f32 %v993, 0.0
        %v997 = vld [vmem:[%s5] sm:$0xff]
        %v998 = vld [vmem:[%s5 + $0x8] sm:$0xff]
        %v999 = vld [vmem:[%s5 + $0x10] sm:$0xff]
        %v1000 = vld [vmem:[%s5 + $0x18] sm:$0xff]
        %v1001 = vld [vmem:[%s5 + $0x20] sm:$0xff]
        %v1002 = vld [vmem:[%s5 + $0x28] sm:$0xff]
        %v1003 = vld [vmem:[%s5 + $0x30] sm:$0xff]
        %v1004 = vld [vmem:[%s5 + $0x38] sm:$0xff]
        %v1005 = vld [vmem:[%s5 + $0x40] sm:$0xff]
        %v1006 = vld [vmem:[%s5 + $0x48] sm:$0xff]
        %v1007 = vld [vmem:[%s5 + $0x50] sm:$0xff]
        %v1008 = vld [vmem:[%s5 + $0x58] sm:$0xff]
        %v1009 = vld [vmem:[%s5 + $0x60] sm:$0xff]
        %v1010 = vld [vmem:[%s5 + $0x68] sm:$0xff]
        %v1011 = vld [vmem:[%s5 + $0x70] sm:$0xff]
        %v1012 = vld [vmem:[%s5 + $0x78] sm:$0xff]
        %v1013 = vld [vmem:[%s6] sm:$0x1]
        %v1015 = vlaneseq
        %v1016 = vshrl.u32 %v1015, 7
        %v1017 = vsub.s32 0, %v1016
        %v1018 = vrot.slane %v1013, %v1017
        %1020 = vmatprep.subr.mxu0 0.0
        %1021 = vmatpush1.msra.mxu0 %v1012
        %1022 = vmatprep.subr.mxu0 0.0
        %1023 = vmatpush1.msra.mxu0 %v1011
        %1024 = vmatprep.subr.mxu0 0.0
        %1025 = vmatpush1.msra.mxu0 %v1010
        %1026 = vmatprep.subr.mxu0 0.0
        %1027 = vmatpush1.msra.mxu0 %v1009
        %1028 = vmatprep.subr.mxu0 0.0
        %1029 = vmatpush1.msra.mxu0 %v1008
        %1030 = vmatprep.subr.mxu0 0.0
        %1031 = vmatpush1.msra.mxu0 %v1007
        %1032 = vmatprep.subr.mxu0 0.0
        %1033 = vmatpush1.msra.mxu0 %v1006
        %1034 = vmatprep.subr.mxu0 0.0
        %1035 = vmatpush1.msra.mxu0 %v1005
        %1036 = vmatprep.subr.mxu0 0.0
        %1037 = vmatpush1.msra.mxu0 %v1004
        %1038 = vmatprep.subr.mxu0 0.0
        %1039 = vmatpush1.msra.mxu0 %v1003
        %1040 = vmatprep.subr.mxu0 0.0
        %1041 = vmatpush1.msra.mxu0 %v1002
        %1042 = vmatprep.subr.mxu0 0.0
        %1043 = vmatpush1.msra.mxu0 %v1001
        %1044 = vmatprep.subr.mxu0 0.0
        %1045 = vmatpush1.msra.mxu0 %v1000
        %1046 = vmatprep.subr.mxu0 0.0
        %1047 = vmatpush1.msra.mxu0 %v999
        %1048 = vmatprep.subr.mxu0 0.0
        %1049 = vmatpush1.msra.mxu0 %v998
        %1050 = vmatprep.subr.mxu0 0.0
        %1051 = vmatpush1.msra.mxu0 %v997
        %1052 = vmatprep.subr.mxu0 0.0
        %1053 = vmatpush2.msra.mxu0 0.0
        %1054 = vmatprep.subr.mxu0 0.0
        %1055 = vmatpush2.msra.mxu0 0.0
        %1056 = vmatprep.subr.mxu0 0.0
        %1057 = vmatpush2.msra.mxu0 0.0
        %1058 = vmatprep.subr.mxu0 0.0
        %1059 = vmatpush2.msra.mxu0 0.0
        %1060 = vmatprep.subr.mxu0 0.0
        %1061 = vmatpush2.msra.mxu0 0.0
        %1062 = vmatprep.subr.mxu0 0.0
        %1063 = vmatpush2.msra.mxu0 0.0
        %1064 = vmatprep.subr.mxu0 0.0
        %1065 = vmatpush2.msra.mxu0 0.0
        %1066 = vmatprep.subr.mxu0 0.0
        %1067 = vmatpush2.msra.mxu0 0.0
        %1068 = vmatprep.subr.mxu0 0.0
        %1069 = vmatpush2.msra.mxu0 0.0
        %1070 = vmatprep.subr.mxu0 0.0
        %1071 = vmatpush2.msra.mxu0 0.0
        %1072 = vmatprep.subr.mxu0 0.0
        %1073 = vmatpush2.msra.mxu0 0.0
        %1074 = vmatprep.subr.mxu0 0.0
        %1075 = vmatpush2.msra.mxu0 0.0
        %1076 = vmatprep.subr.mxu0 0.0
        %1077 = vmatpush2.msra.mxu0 0.0
        %1078 = vmatprep.subr.mxu0 0.0
        %1079 = vmatpush2.msra.mxu0 0.0
        %1080 = vmatprep.subr.mxu0 0.0
        %1081 = vmatpush2.msra.mxu0 0.0
        %1082 = vmatprep.subr.mxu0 0.0
        %1083 = vmatpush2.msra.mxu0 0.0
        %1084 = vmatprep.mubr.f32.mxu0 0.0
        %1085 = vmatmul.mubr.f32.gmra.mxu0 %v996
        %v1086 = vpop.f32.mrf.mxu0
        %v1087 = vadd.f32 %v1018, %v1086
        %v1088 = vpop.f32.mrf.mxu0
        %1089 = vdwg.mxu0
        %v1090 = vlaneseq
        %v1091 = vshrl.u32 %v1090, 7
        %v1092 = vlaneseq
        %v1093 = vand.u32 %v1092, 127
        %vm1094 = vcmp.eq.s32.totalorder %v1091, %v1093
        %v1095 = vlaneseq
        %v1096 = vshrl.u32 %v1095, 7
        %v1097 = vsub.s32 0, %v1096
        %v1098 = vrot.slane %v1087, %v1097
        %v1099 = vsel %vm1094, %v1098, 0.0
        %vm1100 = vcmask 21504
        %v1101 = vsel %vm1100, %v1099, 0.0
        %1102 = vadd.xlane.f32.xlu0 %v1101
        %v1103 = vpop.xlane.xlu0 %1102
        %v1104 = vadd.f32 %v1103, 0.0
        %v1105 = vadd.s32 %v1093, 3
        %vm1106 = vcmp.eq.s32.totalorder %v1091, %v1105
        %v1107 = vlaneseq
        %v1108 = vshrl.u32 %v1107, 7
        %v1109 = vsub.s32 1, %v1108
        %v1110 = vrot.slane %v1087, %v1109
        %v1111 = vsel %vm1106, %v1110, 0.0
        %v1112 = vsel %vm1100, %v1111, 0.0
        %1113 = vadd.xlane.f32.xlu0 %v1112
        %v1114 = vpop.xlane.xlu0 %1113
        %v1115 = vadd.f32 %v1104, %v1114
        %1116 = vst [vmem:[%s286] sm:$0x3f] %v1115
        %s1117 = sand.u32 %s178, 1
        %s1118 = scalar_lea.sflag [#allocation4], %s1117
        %s1119 = sand.u32 %s178, 1
        %s1120 = smul.addr %s1119, 8
        %s1121 = scalar_lea.vmem [#allocation7], %s1120
        // Predicated region
        $region57: #{tpu_custom_call.1} parent=47 // pred_check
          %p1122 = pneg %p188
        $region58: #{tpu_custom_call.1} parent=47 // pred_check_branch
          %1124 = sbr.rel (%p1122) target = $region60
        $region59: #{tpu_custom_call.1} parent=47 // pred_region
          %s1126 = ssub.s32 128, 128
          %1127 = vsyncadd %s1118, %s1126
          %s1128 = smul.addr %s23, 128
          %s1129 = scalar_lea.hbm %s7, %s1128
          %s1131 = sshll.u32 %s1121, 4
          %s1132 = int_to_ptr.vmem [resolvable:$true] %s1131
          %1134 = dma.vmem_to_hbm [thread:$0]  %s1132, 128, %s1129, %s1118
        $region60: #{tpu_custom_call.1} parent=47 // pred_fallthru
          _
      $region48: #{tpu_custom_call.1} parent=5 // pred_fallthru
        _
      %p1135 = scmp.le.s32.totalorder 2, %s18
      // Predicated region
      $region61: #{tpu_custom_call.1} parent=5 // pred_check
        %p1136 = pneg %p1135
      $region62: #{tpu_custom_call.1} parent=5 // pred_check_branch
        %1138 = sbr.rel (%p1136) target = $region64
      $region63: #{tpu_custom_call.1} parent=5 // pred_region
        %s1139 = ssub.s32 %s18, 2
        // Predicated region
        $region65: #{tpu_custom_call.1} parent=63 // pred_check
          %p1140 = pneg %p194
        $region66: #{tpu_custom_call.1} parent=63 // pred_check_branch
          %1142 = sbr.rel (%p1140) target = $region68
        $region67: #{tpu_custom_call.1} parent=63 // pred_region
          %s1143 = sand.u32 %s179, 1
          %s1144 = scalar_lea.sflag [#allocation4], %s1143
          %s1145 = sand.u32 %s179, 1
          %s1146 = smul.addr %s1145, 8
          %s1147 = scalar_lea.vmem [#allocation7], %s1146
          %1148 = dma.done %s1144, 128
        $region68: #{tpu_custom_call.1} parent=63 // pred_fallthru
          _
      $region64: #{tpu_custom_call.1} parent=5 // pred_fallthru
        _
    $region6: #{tpu_custom_call.1} parent=1 // loop_footer
      %s22 = sadd.s32 1, %s18
    $region7: #{tpu_custom_call.1} parent=1 // loop_footer_branch
      %17 = sbr.rel target = $region3
    $region8: #{tpu_custom_call.1} parent=1 // loop_exit
      _
    %1149 = vsyncpa [#allocation3], 1
    %s1150 = scalar_lea.sflag [#allocation3], 1
    %1151 = vsyncpa %s1150, 1
    %1152 = vsyncpa [#allocation6], 1
    %1153 = vsyncpa [#allocation4], 1
    %s1154 = scalar_lea.sflag [#allocation4], 1
    %1155 = vsyncpa %s1154, 1

</llo_original>
